<compile_context>
chip_gen: v5e
topology: v5e:2x2
jax: 0.10.0
libtpu: 0.0.40
codegen_flags: <defaults>
</compile_context>

<pallas_src>
import jax
import jax.numpy as jnp
from jax.experimental import pallas as pl
from jax.experimental.pallas import tpu as pltpu


def _rnn_kernel(xtm_ref, wih1_ref, whh1_ref, wih2_ref, whh2_ref,
                b1_ref, b2_ref, out_ref):
    """Full 2-layer tanh RNN forward in one gridless kernel invocation.

    xtm_ref : (T*B, I)   input sequence, time-major rows (t-major, b-minor)
    wih1_ref: (I, H)     W_ih_l0^T
    whh1_ref: (H, H)     W_hh_l0^T
    wih2_ref: (H, H)     W_ih_l1^T
    whh2_ref: (H, H)     W_hh_l1^T
    b1_ref  : (1, H)     b_ih_l0 + b_hh_l0
    b2_ref  : (1, H)     b_ih_l1 + b_hh_l1
    out_ref : (B, T*H)   layer-2 hidden states, time-major along lanes
    """
    TB, _ = xtm_ref.shape
    B = out_ref.shape[0]
    T = TB // B
    H = whh1_ref.shape[0]

    wih1 = wih1_ref[...]
    whh1 = whh1_ref[...]
    wih2 = wih2_ref[...]
    whh2 = whh2_ref[...]
    b1 = b1_ref[...]
    b2 = b2_ref[...]

    # Hoisted, off-recurrence: the whole layer-1 input projection (+ b1) as a
    # single MXU push.  Per step we only take a static contiguous slice below.
    xp = jnp.dot(xtm_ref[...], wih1, preferred_element_type=jnp.float32) + b1  # (T*B, H)

    # h0 = zeros for both layers (matches torch.zeros(num_layers, B, H)).
    h1 = jnp.zeros((B, H), jnp.float32)
    h2 = jnp.zeros((B, H), jnp.float32)

    outs = []
    # T is static & tiny: this Python loop fully unrolls at trace time, so the
    # recurrence is one straight-line dependency chain of 2 small matmuls/step,
    # with the off-chain pieces free to overlap.
    for t in range(T):
        # Off the serial h1 chain:
        xp_t = xp[t * B:(t + 1) * B, :]                      # (B, H), precomputed
        h2_part = jnp.dot(h2, whh2,
                          preferred_element_type=jnp.float32) + b2  # depends on prev h2 only

        # Serial chain: h1_t = tanh(xp_t + h1_{t-1} @ W_hh1^T)
        h1 = jnp.tanh(xp_t + jnp.dot(h1, whh1,
                                     preferred_element_type=jnp.float32))
        # h2_t = tanh(h2_part + h1_t @ W_ih2^T)
        h2 = jnp.tanh(h2_part + jnp.dot(h1, wih2,
                                        preferred_element_type=jnp.float32))
        outs.append(h2)

    # Single unmasked, lane-dense store: (B, T*H) with last dim a multiple of 128.
    out_ref[...] = jnp.concatenate(outs, axis=-1)


@jax.jit
def vanilla_rnn_forward(x, packed_params):
    """x: (B, T, I) float32, batch_first like nn.RNN(batch_first=True).

    Returns (B, T * hidden_size) == out.reshape(out.shape[0], -1) in PyTorch.
    The final hidden state h_n is dropped, matching `out, _ = self.rnn(x, h0)`.
    """
    wih1_t, whh1_t, wih2_t, whh2_t, b1, b2 = packed_params
    B, T, I = x.shape
    H = whh1_t.shape[0]

    # Time-major 2-D view so the kernel's hoisted input projection is one plain
    # (T*B, I) @ (I, H) matmul with contiguous static per-step slices.
    x_tm = jnp.transpose(x, (1, 0, 2)).reshape(T * B, I)

    vmem = pl.BlockSpec(memory_space=pltpu.MemorySpace.VMEM)
    return pl.pallas_call(
        _rnn_kernel,
        out_shape=jax.ShapeDtypeStruct((B, T * H), jnp.float32),
        in_specs=[vmem] * 7,
        out_specs=vmem,
        # Gridless on purpose: whole working set is tiny and VMEM-resident, so
        # no pipelining / vmem_limit tuning can help here.  If batch grows,
        # add a "parallel" batch grid axis (helps v7x's 2 TensorCores).
    )(x_tm, wih1_t, whh1_t, wih2_t, whh2_t, b1, b2)


def init_params(key, input_size, hidden_size):
    """Deterministic init in PyTorch nn.RNN layout:
    W_ih_l*: (H, in), W_hh_l*: (H, H), b_ih_l*/b_hh_l*: (H,)."""
    bound = 1.0 / jnp.sqrt(jnp.float32(hidden_size))
    ks = jax.random.split(key, 8)
    u = lambda k, shape: jax.random.uniform(k, shape, jnp.float32, -bound, bound)
    return dict(
        w_ih1=u(ks[0], (hidden_size, input_size)),
        w_hh1=u(ks[1], (hidden_size, hidden_size)),
        b_ih1=u(ks[2], (hidden_size,)),
        b_hh1=u(ks[3], (hidden_size,)),
        w_ih2=u(ks[4], (hidden_size, hidden_size)),
        w_hh2=u(ks[5], (hidden_size, hidden_size)),
        b_ih2=u(ks[6], (hidden_size,)),
        b_hh2=u(ks[7], (hidden_size,)),
    )


def pack_params(p):
    """Kernel layout: pre-transpose weights to (in, H) and fold b_ih + b_hh."""
    return (p["w_ih1"].T, p["w_hh1"].T, p["w_ih2"].T, p["w_hh2"].T,
            (p["b_ih1"] + p["b_hh1"])[None, :],
            (p["b_ih2"] + p["b_hh2"])[None, :])


def reference_forward(x, p):
    """Pure-JAX reference using the *unpacked* PyTorch-layout parameters and the
    standard nn.RNN recurrence — not circular w.r.t. the kernel packing."""
    B, T, _ = x.shape
    H = p["w_hh1"].shape[0]
    h1 = jnp.zeros((B, H), jnp.float32)
    h2 = jnp.zeros((B, H), jnp.float32)
    outs = []
    for t in range(T):
        h1 = jnp.tanh(x[:, t, :] @ p["w_ih1"].T + p["b_ih1"]
                      + h1 @ p["w_hh1"].T + p["b_hh1"])
        h2 = jnp.tanh(h1 @ p["w_ih2"].T + p["b_ih2"]
                      + h2 @ p["w_hh2"].T + p["b_hh2"])
        outs.append(h2)
    return jnp.concatenate(outs, axis=-1)                   # == out.reshape(B, -1)


if __name__ == "__main__":
    # Small shapes consistent with the module: batch=2, seq_len=8, input_size=16,
    # hidden_size=32, num_layers=2.
    B, T, I, H = 2, 8, 16, 32

    key = jax.random.PRNGKey(0)
    k_x, k_p = jax.random.split(key)
    x = jax.random.normal(k_x, (B, T, I), jnp.float32)

    params = init_params(k_p, I, H)          # PyTorch-layout params
    packed = pack_params(params)             # kernel-layout params

    out = vanilla_rnn_forward(x, packed)
    out = jax.block_until_ready(out)

    ref = reference_forward(x, params)
    assert out.shape == (B, T * H), out.shape
    assert jnp.allclose(out, ref, atol=1e-5, rtol=1e-5), "mismatch vs JAX reference"

    print("KERNEL_OK")
</pallas_src>

<mosaic_0001>
module attributes {stable_mosaic.version = 11 : i64} {
  func.func @_rnn_kernel(%arg0: memref<16x16xf32, #tpu.memory_space<vmem>>, %arg1: memref<16x32xf32, #tpu.memory_space<vmem>>, %arg2: memref<32x32xf32, #tpu.memory_space<vmem>>, %arg3: memref<32x32xf32, #tpu.memory_space<vmem>>, %arg4: memref<32x32xf32, #tpu.memory_space<vmem>>, %arg5: memref<1x32xf32, #tpu.memory_space<vmem>>, %arg6: memref<1x32xf32, #tpu.memory_space<vmem>>, %arg7: memref<2x256xf32, #tpu.memory_space<vmem>>) attributes {dimension_semantics = [], scalar_prefetch = 0 : i64, scratch_operands = 0 : i64, tpu.core_type = #tpu.core_type<tc>} {
    %c0 = arith.constant 0 : index
    %c0_0 = arith.constant 0 : index
    %0 = vector.load %arg1[%c0, %c0_0] : memref<16x32xf32, #tpu.memory_space<vmem>>, vector<16x32xf32>
    %c0_1 = arith.constant 0 : index
    %c0_2 = arith.constant 0 : index
    %1 = vector.load %arg2[%c0_1, %c0_2] : memref<32x32xf32, #tpu.memory_space<vmem>>, vector<32x32xf32>
    %c0_3 = arith.constant 0 : index
    %c0_4 = arith.constant 0 : index
    %2 = vector.load %arg3[%c0_3, %c0_4] : memref<32x32xf32, #tpu.memory_space<vmem>>, vector<32x32xf32>
    %c0_5 = arith.constant 0 : index
    %c0_6 = arith.constant 0 : index
    %3 = vector.load %arg4[%c0_5, %c0_6] : memref<32x32xf32, #tpu.memory_space<vmem>>, vector<32x32xf32>
    %c0_7 = arith.constant 0 : index
    %c0_8 = arith.constant 0 : index
    %4 = vector.load %arg5[%c0_7, %c0_8] : memref<1x32xf32, #tpu.memory_space<vmem>>, vector<1x32xf32>
    %c0_9 = arith.constant 0 : index
    %c0_10 = arith.constant 0 : index
    %5 = vector.load %arg6[%c0_9, %c0_10] : memref<1x32xf32, #tpu.memory_space<vmem>>, vector<1x32xf32>
    %c0_11 = arith.constant 0 : index
    %c0_12 = arith.constant 0 : index
    %6 = vector.load %arg0[%c0_11, %c0_12] : memref<16x16xf32, #tpu.memory_space<vmem>>, vector<16x16xf32>
    %cst = arith.constant dense<0.000000e+00> : vector<16x32xf32>
    %7 = tpu.matmul %6, %0, %cst {dimension_numbers = #tpu.dot_dimension_numbers<[1], [0], [0], [1], [0, 0, 1, 1], [], []>} : vector<16x16xf32>, vector<16x32xf32>, vector<16x32xf32> -> vector<16x32xf32>
    %8 = vector.broadcast %4 : vector<1x32xf32> to vector<16x32xf32>
    %9 = arith.addf %7, %8 : vector<16x32xf32>
    %cst_13 = arith.constant 0.000000e+00 : f32
    %10 = vector.broadcast %cst_13 : f32 to vector<2x32xf32>
    %cst_14 = arith.constant 0.000000e+00 : f32
    %11 = vector.broadcast %cst_14 : f32 to vector<2x32xf32>
    %12 = vector.extract_strided_slice %9 {offsets = [0, 0], sizes = [2, 32], strides = [1, 1]} : vector<16x32xf32> to vector<2x32xf32>
    %cst_15 = arith.constant dense<0.000000e+00> : vector<2x32xf32>
    %13 = tpu.matmul %11, %3, %cst_15 {dimension_numbers = #tpu.dot_dimension_numbers<[1], [0], [0], [1], [0, 0, 1, 1], [], []>} : vector<2x32xf32>, vector<32x32xf32>, vector<2x32xf32> -> vector<2x32xf32>
    %14 = vector.broadcast %5 : vector<1x32xf32> to vector<2x32xf32>
    %15 = arith.addf %13, %14 : vector<2x32xf32>
    %cst_16 = arith.constant dense<0.000000e+00> : vector<2x32xf32>
    %16 = tpu.matmul %10, %1, %cst_16 {dimension_numbers = #tpu.dot_dimension_numbers<[1], [0], [0], [1], [0, 0, 1, 1], [], []>} : vector<2x32xf32>, vector<32x32xf32>, vector<2x32xf32> -> vector<2x32xf32>
    %17 = arith.addf %12, %16 : vector<2x32xf32>
    %18 = math.tanh %17 : vector<2x32xf32>
    %cst_17 = arith.constant dense<0.000000e+00> : vector<2x32xf32>
    %19 = tpu.matmul %18, %2, %cst_17 {dimension_numbers = #tpu.dot_dimension_numbers<[1], [0], [0], [1], [0, 0, 1, 1], [], []>} : vector<2x32xf32>, vector<32x32xf32>, vector<2x32xf32> -> vector<2x32xf32>
    %20 = arith.addf %15, %19 : vector<2x32xf32>
    %21 = math.tanh %20 : vector<2x32xf32>
    %22 = vector.extract_strided_slice %9 {offsets = [2, 0], sizes = [2, 32], strides = [1, 1]} : vector<16x32xf32> to vector<2x32xf32>
    %cst_18 = arith.constant dense<0.000000e+00> : vector<2x32xf32>
    %23 = tpu.matmul %21, %3, %cst_18 {dimension_numbers = #tpu.dot_dimension_numbers<[1], [0], [0], [1], [0, 0, 1, 1], [], []>} : vector<2x32xf32>, vector<32x32xf32>, vector<2x32xf32> -> vector<2x32xf32>
    %24 = vector.broadcast %5 : vector<1x32xf32> to vector<2x32xf32>
    %25 = arith.addf %23, %24 : vector<2x32xf32>
    %cst_19 = arith.constant dense<0.000000e+00> : vector<2x32xf32>
    %26 = tpu.matmul %18, %1, %cst_19 {dimension_numbers = #tpu.dot_dimension_numbers<[1], [0], [0], [1], [0, 0, 1, 1], [], []>} : vector<2x32xf32>, vector<32x32xf32>, vector<2x32xf32> -> vector<2x32xf32>
    %27 = arith.addf %22, %26 : vector<2x32xf32>
    %28 = math.tanh %27 : vector<2x32xf32>
    %cst_20 = arith.constant dense<0.000000e+00> : vector<2x32xf32>
    %29 = tpu.matmul %28, %2, %cst_20 {dimension_numbers = #tpu.dot_dimension_numbers<[1], [0], [0], [1], [0, 0, 1, 1], [], []>} : vector<2x32xf32>, vector<32x32xf32>, vector<2x32xf32> -> vector<2x32xf32>
    %30 = arith.addf %25, %29 : vector<2x32xf32>
    %31 = math.tanh %30 : vector<2x32xf32>
    %32 = vector.extract_strided_slice %9 {offsets = [4, 0], sizes = [2, 32], strides = [1, 1]} : vector<16x32xf32> to vector<2x32xf32>
    %cst_21 = arith.constant dense<0.000000e+00> : vector<2x32xf32>
    %33 = tpu.matmul %31, %3, %cst_21 {dimension_numbers = #tpu.dot_dimension_numbers<[1], [0], [0], [1], [0, 0, 1, 1], [], []>} : vector<2x32xf32>, vector<32x32xf32>, vector<2x32xf32> -> vector<2x32xf32>
    %34 = vector.broadcast %5 : vector<1x32xf32> to vector<2x32xf32>
    %35 = arith.addf %33, %34 : vector<2x32xf32>
    %cst_22 = arith.constant dense<0.000000e+00> : vector<2x32xf32>
    %36 = tpu.matmul %28, %1, %cst_22 {dimension_numbers = #tpu.dot_dimension_numbers<[1], [0], [0], [1], [0, 0, 1, 1], [], []>} : vector<2x32xf32>, vector<32x32xf32>, vector<2x32xf32> -> vector<2x32xf32>
    %37 = arith.addf %32, %36 : vector<2x32xf32>
    %38 = math.tanh %37 : vector<2x32xf32>
    %cst_23 = arith.constant dense<0.000000e+00> : vector<2x32xf32>
    %39 = tpu.matmul %38, %2, %cst_23 {dimension_numbers = #tpu.dot_dimension_numbers<[1], [0], [0], [1], [0, 0, 1, 1], [], []>} : vector<2x32xf32>, vector<32x32xf32>, vector<2x32xf32> -> vector<2x32xf32>
    %40 = arith.addf %35, %39 : vector<2x32xf32>
    %41 = math.tanh %40 : vector<2x32xf32>
    %42 = vector.extract_strided_slice %9 {offsets = [6, 0], sizes = [2, 32], strides = [1, 1]} : vector<16x32xf32> to vector<2x32xf32>
    %cst_24 = arith.constant dense<0.000000e+00> : vector<2x32xf32>
    %43 = tpu.matmul %41, %3, %cst_24 {dimension_numbers = #tpu.dot_dimension_numbers<[1], [0], [0], [1], [0, 0, 1, 1], [], []>} : vector<2x32xf32>, vector<32x32xf32>, vector<2x32xf32> -> vector<2x32xf32>
    %44 = vector.broadcast %5 : vector<1x32xf32> to vector<2x32xf32>
    %45 = arith.addf %43, %44 : vector<2x32xf32>
    %cst_25 = arith.constant dense<0.000000e+00> : vector<2x32xf32>
    %46 = tpu.matmul %38, %1, %cst_25 {dimension_numbers = #tpu.dot_dimension_numbers<[1], [0], [0], [1], [0, 0, 1, 1], [], []>} : vector<2x32xf32>, vector<32x32xf32>, vector<2x32xf32> -> vector<2x32xf32>
    %47 = arith.addf %42, %46 : vector<2x32xf32>
    %48 = math.tanh %47 : vector<2x32xf32>
    %cst_26 = arith.constant dense<0.000000e+00> : vector<2x32xf32>
    %49 = tpu.matmul %48, %2, %cst_26 {dimension_numbers = #tpu.dot_dimension_numbers<[1], [0], [0], [1], [0, 0, 1, 1], [], []>} : vector<2x32xf32>, vector<32x32xf32>, vector<2x32xf32> -> vector<2x32xf32>
    %50 = arith.addf %45, %49 : vector<2x32xf32>
    %51 = math.tanh %50 : vector<2x32xf32>
    %52 = vector.extract_strided_slice %9 {offsets = [8, 0], sizes = [2, 32], strides = [1, 1]} : vector<16x32xf32> to vector<2x32xf32>
    %cst_27 = arith.constant dense<0.000000e+00> : vector<2x32xf32>
    %53 = tpu.matmul %51, %3, %cst_27 {dimension_numbers = #tpu.dot_dimension_numbers<[1], [0], [0], [1], [0, 0, 1, 1], [], []>} : vector<2x32xf32>, vector<32x32xf32>, vector<2x32xf32> -> vector<2x32xf32>
    %54 = vector.broadcast %5 : vector<1x32xf32> to vector<2x32xf32>
    %55 = arith.addf %53, %54 : vector<2x32xf32>
    %cst_28 = arith.constant dense<0.000000e+00> : vector<2x32xf32>
    %56 = tpu.matmul %48, %1, %cst_28 {dimension_numbers = #tpu.dot_dimension_numbers<[1], [0], [0], [1], [0, 0, 1, 1], [], []>} : vector<2x32xf32>, vector<32x32xf32>, vector<2x32xf32> -> vector<2x32xf32>
    %57 = arith.addf %52, %56 : vector<2x32xf32>
    %58 = math.tanh %57 : vector<2x32xf32>
    %cst_29 = arith.constant dense<0.000000e+00> : vector<2x32xf32>
    %59 = tpu.matmul %58, %2, %cst_29 {dimension_numbers = #tpu.dot_dimension_numbers<[1], [0], [0], [1], [0, 0, 1, 1], [], []>} : vector<2x32xf32>, vector<32x32xf32>, vector<2x32xf32> -> vector<2x32xf32>
    %60 = arith.addf %55, %59 : vector<2x32xf32>
    %61 = math.tanh %60 : vector<2x32xf32>
    %62 = vector.extract_strided_slice %9 {offsets = [10, 0], sizes = [2, 32], strides = [1, 1]} : vector<16x32xf32> to vector<2x32xf32>
    %cst_30 = arith.constant dense<0.000000e+00> : vector<2x32xf32>
    %63 = tpu.matmul %61, %3, %cst_30 {dimension_numbers = #tpu.dot_dimension_numbers<[1], [0], [0], [1], [0, 0, 1, 1], [], []>} : vector<2x32xf32>, vector<32x32xf32>, vector<2x32xf32> -> vector<2x32xf32>
    %64 = vector.broadcast %5 : vector<1x32xf32> to vector<2x32xf32>
    %65 = arith.addf %63, %64 : vector<2x32xf32>
    %cst_31 = arith.constant dense<0.000000e+00> : vector<2x32xf32>
    %66 = tpu.matmul %58, %1, %cst_31 {dimension_numbers = #tpu.dot_dimension_numbers<[1], [0], [0], [1], [0, 0, 1, 1], [], []>} : vector<2x32xf32>, vector<32x32xf32>, vector<2x32xf32> -> vector<2x32xf32>
    %67 = arith.addf %62, %66 : vector<2x32xf32>
    %68 = math.tanh %67 : vector<2x32xf32>
    %cst_32 = arith.constant dense<0.000000e+00> : vector<2x32xf32>
    %69 = tpu.matmul %68, %2, %cst_32 {dimension_numbers = #tpu.dot_dimension_numbers<[1], [0], [0], [1], [0, 0, 1, 1], [], []>} : vector<2x32xf32>, vector<32x32xf32>, vector<2x32xf32> -> vector<2x32xf32>
    %70 = arith.addf %65, %69 : vector<2x32xf32>
    %71 = math.tanh %70 : vector<2x32xf32>
    %72 = vector.extract_strided_slice %9 {offsets = [12, 0], sizes = [2, 32], strides = [1, 1]} : vector<16x32xf32> to vector<2x32xf32>
    %cst_33 = arith.constant dense<0.000000e+00> : vector<2x32xf32>
    %73 = tpu.matmul %71, %3, %cst_33 {dimension_numbers = #tpu.dot_dimension_numbers<[1], [0], [0], [1], [0, 0, 1, 1], [], []>} : vector<2x32xf32>, vector<32x32xf32>, vector<2x32xf32> -> vector<2x32xf32>
    %74 = vector.broadcast %5 : vector<1x32xf32> to vector<2x32xf32>
    %75 = arith.addf %73, %74 : vector<2x32xf32>
    %cst_34 = arith.constant dense<0.000000e+00> : vector<2x32xf32>
    %76 = tpu.matmul %68, %1, %cst_34 {dimension_numbers = #tpu.dot_dimension_numbers<[1], [0], [0], [1], [0, 0, 1, 1], [], []>} : vector<2x32xf32>, vector<32x32xf32>, vector<2x32xf32> -> vector<2x32xf32>
    %77 = arith.addf %72, %76 : vector<2x32xf32>
    %78 = math.tanh %77 : vector<2x32xf32>
    %cst_35 = arith.constant dense<0.000000e+00> : vector<2x32xf32>
    %79 = tpu.matmul %78, %2, %cst_35 {dimension_numbers = #tpu.dot_dimension_numbers<[1], [0], [0], [1], [0, 0, 1, 1], [], []>} : vector<2x32xf32>, vector<32x32xf32>, vector<2x32xf32> -> vector<2x32xf32>
    %80 = arith.addf %75, %79 : vector<2x32xf32>
    %81 = math.tanh %80 : vector<2x32xf32>
    %82 = vector.extract_strided_slice %9 {offsets = [14, 0], sizes = [2, 32], strides = [1, 1]} : vector<16x32xf32> to vector<2x32xf32>
    %cst_36 = arith.constant dense<0.000000e+00> : vector<2x32xf32>
    %83 = tpu.matmul %81, %3, %cst_36 {dimension_numbers = #tpu.dot_dimension_numbers<[1], [0], [0], [1], [0, 0, 1, 1], [], []>} : vector<2x32xf32>, vector<32x32xf32>, vector<2x32xf32> -> vector<2x32xf32>
    %84 = vector.broadcast %5 : vector<1x32xf32> to vector<2x32xf32>
    %85 = arith.addf %83, %84 : vector<2x32xf32>
    %cst_37 = arith.constant dense<0.000000e+00> : vector<2x32xf32>
    %86 = tpu.matmul %78, %1, %cst_37 {dimension_numbers = #tpu.dot_dimension_numbers<[1], [0], [0], [1], [0, 0, 1, 1], [], []>} : vector<2x32xf32>, vector<32x32xf32>, vector<2x32xf32> -> vector<2x32xf32>
    %87 = arith.addf %82, %86 : vector<2x32xf32>
    %88 = math.tanh %87 : vector<2x32xf32>
    %cst_38 = arith.constant dense<0.000000e+00> : vector<2x32xf32>
    %89 = tpu.matmul %88, %2, %cst_38 {dimension_numbers = #tpu.dot_dimension_numbers<[1], [0], [0], [1], [0, 0, 1, 1], [], []>} : vector<2x32xf32>, vector<32x32xf32>, vector<2x32xf32> -> vector<2x32xf32>
    %90 = arith.addf %85, %89 : vector<2x32xf32>
    %91 = math.tanh %90 : vector<2x32xf32>
    %92 = tpu.concatenate %21, %31, %41, %51, %61, %71, %81, %91 in 1 : vector<2x32xf32>, vector<2x32xf32>, vector<2x32xf32>, vector<2x32xf32>, vector<2x32xf32>, vector<2x32xf32>, vector<2x32xf32>, vector<2x32xf32> -> vector<2x256xf32>
    %c0_39 = arith.constant 0 : index
    %c0_40 = arith.constant 0 : index
    %93 = vector.load %arg7[%c0_39, %c0_40] : memref<2x256xf32, #tpu.memory_space<vmem>>, vector<2x256xf32>
    tpu.vector_store %arg7[%c0_39, %c0_40], %92 {strides = array<i32>} : memref<2x256xf32, #tpu.memory_space<vmem>>, vector<2x256xf32>,
    return
  }
}

</mosaic_0001>

<llo_original>
// kernel: vanilla_rnn_forward.1
$region0: #{vanilla_rnn_forward.1}
  #allocation0 [shape = 'u32[]', space=smem, size = 0x4, offset = 0x4, fixed_abs, tag = 'smem constant byte address 0x4 - core index']
  #allocation1 [shape = 'u32[72,128]{1,0:T(1,128)}', space=vmem, size = 0x9000, scoped, tag = 'internal scratch']
  %s0 = inlined_call_operand.vmem [shape: f32[16,16], index: 0, kind: input, shape index: {}]
  %s1 = inlined_call_operand.hbm [shape: f32[16,32], index: 1, kind: input, shape index: {}]
  %s2 = inlined_call_operand.vmem [shape: f32[32,32], index: 2, kind: input, shape index: {}]
  %s3 = inlined_call_operand.hbm [shape: f32[32,32], index: 3, kind: input, shape index: {}]
  %s4 = inlined_call_operand.hbm [shape: f32[32,32], index: 4, kind: input, shape index: {}]
  %s5 = inlined_call_operand.vmem [shape: f32[1,32], index: 5, kind: input, shape index: {}]
  %s6 = inlined_call_operand.vmem [shape: f32[1,32], index: 6, kind: input, shape index: {}]
  %s7 = inlined_call_operand.hbm [shape: f32[2,256], index: 7, kind: output, shape index: {}]
  %s8 = sld [smem:[#allocation0]]
  $region50: #{vanilla_rnn_forward.1} parent=0
    _
  %s10 = ssub.s32 1, %s8
  %s11 = scalar_select 0, %s10, %s8
  $region1: #{vanilla_rnn_forward.1} parent=0
    #allocation2 [shape = 'u8[8192]{0}', space=vmem, size = 0x2000, scoped, tag = 'input window, operand 1, single buffered']
    #allocation3 [shape = 's32[1]{0}', space=sflag, size = 0x4, scoped, tag = 'scoped memory for vanilla_rnn_forward.1']
    #allocation4 [shape = 's32[1]{0}', space=sflag, size = 0x4, scoped, tag = 'scoped memory for vanilla_rnn_forward.1']
    #allocation5 [shape = 'u8[16384]{0}', space=vmem, size = 0x4000, scoped, tag = 'input window, operand 3, single buffered']
    #allocation6 [shape = 's32[1]{0}', space=sflag, size = 0x4, scoped, tag = 'scoped memory for vanilla_rnn_forward.1']
    #allocation7 [shape = 'u8[16384]{0}', space=vmem, size = 0x4000, scoped, tag = 'input window, operand 4, single buffered']
    #allocation8 [shape = 'u8[2048]{0}', space=vmem, size = 0x800, scoped, tag = 'output window, operand 0, single buffered']
    %12 = vsyncpa [#allocation3], 0
    %13 = vsyncpa [#allocation6], 0
    %14 = vsyncpa [#allocation4], 0
    // Predicated region
    $region2: #{vanilla_rnn_forward.1} parent=1 // pred_check
      _
    $region3: #{vanilla_rnn_forward.1} parent=1 // pred_check_branch
      %16 = sbr.rel (0) target = $region5
    $region4: #{vanilla_rnn_forward.1} parent=1 // pred_region
      _
    $region5: #{vanilla_rnn_forward.1} parent=1 // pred_fallthru
      _
    // Predicated region
    $region6: #{vanilla_rnn_forward.1} parent=1 // pred_check
      _
    $region7: #{vanilla_rnn_forward.1} parent=1 // pred_check_branch
      %18 = sbr.rel (0) target = $region9
    $region8: #{vanilla_rnn_forward.1} parent=1 // pred_region
      %20 = vsyncadd [#allocation3], 0
      %s21 = sshll.u32 %s1, 4
      %s22 = int_to_ptr.hbm [resolvable:$true] %s21
      %s23 = sshll.u32 [#allocation2], 4
      %s24 = int_to_ptr.vmem [resolvable:$true] %s23
      %29 = dma.hbm_to_vmem [thread:$0]  %s22, 256, %s24, [#allocation3], 128, 128, 8
    $region9: #{vanilla_rnn_forward.1} parent=1 // pred_fallthru
      _
    // Predicated region
    $region10: #{vanilla_rnn_forward.1} parent=1 // pred_check
      _
    $region11: #{vanilla_rnn_forward.1} parent=1 // pred_check_branch
      %31 = sbr.rel (0) target = $region13
    $region12: #{vanilla_rnn_forward.1} parent=1 // pred_region
      _
    $region13: #{vanilla_rnn_forward.1} parent=1 // pred_fallthru
      _
    // Predicated region
    $region14: #{vanilla_rnn_forward.1} parent=1 // pred_check
      _
    $region15: #{vanilla_rnn_forward.1} parent=1 // pred_check_branch
      %33 = sbr.rel (0) target = $region17
    $region16: #{vanilla_rnn_forward.1} parent=1 // pred_region
      %35 = vsyncadd [#allocation6], 0
      %s36 = sshll.u32 %s3, 4
      %s37 = int_to_ptr.hbm [resolvable:$true] %s36
      %s38 = sshll.u32 [#allocation5], 4
      %s39 = int_to_ptr.vmem [resolvable:$true] %s38
      %44 = dma.hbm_to_vmem [thread:$0]  %s37, 512, %s39, [#allocation6], 128, 128, 8
    $region17: #{vanilla_rnn_forward.1} parent=1 // pred_fallthru
      _
    // Predicated region
    $region18: #{vanilla_rnn_forward.1} parent=1 // pred_check
      _
    $region19: #{vanilla_rnn_forward.1} parent=1 // pred_check_branch
      %46 = sbr.rel (0) target = $region21
    $region20: #{vanilla_rnn_forward.1} parent=1 // pred_region
      %48 = vsyncadd [#allocation6], 0
      %s49 = sshll.u32 %s4, 4
      %s50 = int_to_ptr.hbm [resolvable:$true] %s49
      %s51 = sshll.u32 [#allocation7], 4
      %s52 = int_to_ptr.vmem [resolvable:$true] %s51
      %57 = dma.hbm_to_vmem [thread:$0]  %s50, 512, %s52, [#allocation6], 128, 128, 8
    $region21: #{vanilla_rnn_forward.1} parent=1 // pred_fallthru
      _
    // Predicated region
    $region22: #{vanilla_rnn_forward.1} parent=1 // pred_check
      _
    $region23: #{vanilla_rnn_forward.1} parent=1 // pred_check_branch
      %59 = sbr.rel (0) target = $region25
    $region24: #{vanilla_rnn_forward.1} parent=1 // pred_region
      _
    $region25: #{vanilla_rnn_forward.1} parent=1 // pred_fallthru
      _
    // Predicated region
    $region26: #{vanilla_rnn_forward.1} parent=1 // pred_check
      _
    $region27: #{vanilla_rnn_forward.1} parent=1 // pred_check_branch
      %61 = sbr.rel (0) target = $region29
    $region28: #{vanilla_rnn_forward.1} parent=1 // pred_region
      _
    $region29: #{vanilla_rnn_forward.1} parent=1 // pred_fallthru
      _
    // Predicated region
    $region30: #{vanilla_rnn_forward.1} parent=1 // pred_check
      _
    $region31: #{vanilla_rnn_forward.1} parent=1 // pred_check_branch
      %63 = sbr.rel (0) target = $region33
    $region32: #{vanilla_rnn_forward.1} parent=1 // pred_region
      %65 = dma.done [#allocation3], 256
    $region33: #{vanilla_rnn_forward.1} parent=1 // pred_fallthru
      _
    // Predicated region
    $region34: #{vanilla_rnn_forward.1} parent=1 // pred_check
      _
    $region35: #{vanilla_rnn_forward.1} parent=1 // pred_check_branch
      %67 = sbr.rel (0) target = $region37
    $region36: #{vanilla_rnn_forward.1} parent=1 // pred_region
      %69 = dma.done [#allocation6], 512
    $region37: #{vanilla_rnn_forward.1} parent=1 // pred_fallthru
      _
    // Predicated region
    $region38: #{vanilla_rnn_forward.1} parent=1 // pred_check
      _
    $region39: #{vanilla_rnn_forward.1} parent=1 // pred_check_branch
      %71 = sbr.rel (0) target = $region41
    $region40: #{vanilla_rnn_forward.1} parent=1 // pred_region
      %73 = dma.done [#allocation6], 512
    $region41: #{vanilla_rnn_forward.1} parent=1 // pred_fallthru
      _
    %v74 = vld [vmem:[#allocation2] sm:$0xff]
    %v75 = vld [vmem:[#allocation2 + $0x8] sm:$0xff]
    %v76 = vld [vmem:[%s2] sm:$0xff]
    %v77 = vld [vmem:[%s2 + $0x8] sm:$0xff]
    %v78 = vld [vmem:[%s2 + $0x10] sm:$0xff]
    %v79 = vld [vmem:[%s2 + $0x18] sm:$0xff]
    %v80 = vld [vmem:[#allocation5] sm:$0xff]
    %v81 = vld [vmem:[#allocation5 + $0x8] sm:$0xff]
    %v82 = vld [vmem:[#allocation5 + $0x10] sm:$0xff]
    %v83 = vld [vmem:[#allocation5 + $0x18] sm:$0xff]
    %v84 = vld [vmem:[#allocation7] sm:$0xff]
    %v85 = vld [vmem:[#allocation7 + $0x8] sm:$0xff]
    %v86 = vld [vmem:[#allocation7 + $0x10] sm:$0xff]
    %v87 = vld [vmem:[#allocation7 + $0x18] sm:$0xff]
    %v88 = vld [vmem:[%s5] sm:$0x1]
    %v89 = vld [vmem:[%s6] sm:$0x1]
    %v90 = vld [vmem:[%s0] sm:$0xff]
    %v91 = vld [vmem:[%s0 + $0x8] sm:$0xff]
    %v93 = vperm.slane %v88, 0
    %vm95 = vcmask 130048
    %v97 = vsel %vm95, %v90, 0
    %v100 = vsel %vm95, %v91, 0
    %102 = vmatpush.msra.mxu0 0.0
    %103 = vmatpush.msra.mxu0 0.0
    %104 = vmatpush.msra.mxu0 0.0
    %105 = vmatpush.msra.mxu0 0.0
    %106 = vmatpush.msra.mxu0 0.0
    %107 = vmatpush.msra.mxu0 0.0
    %108 = vmatpush.msra.mxu0 0.0
    %109 = vmatpush.msra.mxu0 0.0
    %110 = vmatpush.msra.mxu0 0.0
    %111 = vmatpush.msra.mxu0 0.0
    %112 = vmatpush.msra.mxu0 0.0
    %113 = vmatpush.msra.mxu0 0.0
    %114 = vmatpush.msra.mxu0 0.0
    %115 = vmatpush.msra.mxu0 0.0
    %116 = vmatpush.msra.mxu0 %v75
    %117 = vmatpush.msra.mxu0 %v74
    %118 = vmatmul.f32.gmra.mxu0 %v97
    %v119 = vpop.f32.mrf.mxu0
    %v120 = vadd.f32 %v93, %v119
    %121 = vmatmul.f32.gmra.mxu0 %v100
    %v122 = vpop.f32.mrf.mxu0
    %v123 = vadd.f32 %v93, %v122
    %124 = vdwg.mxu0
    %v126 = vperm.slane %v89, 0
    %vm128 = vcmask 261120
    %v130 = vsel %vm128, 0.0, 0
    %132 = vmatpush.msra.mxu0 0.0
    %133 = vmatpush.msra.mxu0 0.0
    %134 = vmatpush.msra.mxu0 0.0
    %135 = vmatpush.msra.mxu0 0.0
    %136 = vmatpush.msra.mxu0 0.0
    %137 = vmatpush.msra.mxu0 0.0
    %138 = vmatpush.msra.mxu0 0.0
    %139 = vmatpush.msra.mxu0 0.0
    %140 = vmatpush.msra.mxu0 0.0
    %141 = vmatpush.msra.mxu0 0.0
    %142 = vmatpush.msra.mxu0 0.0
    %143 = vmatpush.msra.mxu0 0.0
    %144 = vmatpush.msra.mxu0 %v87
    %145 = vmatpush.msra.mxu0 %v86
    %146 = vmatpush.msra.mxu0 %v85
    %147 = vmatpush.msra.mxu0 %v84
    %148 = vmatmul.f32.gmra.mxu0 %v130
    %v149 = vpop.f32.mrf.mxu0
    %v150 = vadd.f32 %v126, %v149
    %151 = vdwg.mxu0
    %152 = vmatpush.msra.mxu0 0.0
    %153 = vmatpush.msra.mxu0 0.0
    %154 = vmatpush.msra.mxu0 0.0
    %155 = vmatpush.msra.mxu0 0.0
    %156 = vmatpush.msra.mxu0 0.0
    %157 = vmatpush.msra.mxu0 0.0
    %158 = vmatpush.msra.mxu0 0.0
    %159 = vmatpush.msra.mxu0 0.0
    %160 = vmatpush.msra.mxu0 0.0
    %161 = vmatpush.msra.mxu0 0.0
    %162 = vmatpush.msra.mxu0 0.0
    %163 = vmatpush.msra.mxu0 0.0
    %164 = vmatpush.msra.mxu0 %v79
    %165 = vmatpush.msra.mxu0 %v78
    %166 = vmatpush.msra.mxu0 %v77
    %167 = vmatpush.msra.mxu0 %v76
    %168 = vmatmul.f32.gmra.mxu0 %v130
    %v169 = vpop.f32.mrf.mxu0
    %v170 = vadd.f32 0.0, %v169
    %171 = vdwg.mxu0
    %v172 = vadd.f32 %v120, %v170
    %v173 = vtanh.pop %v172
    %v175 = vsel %vm128, %v173, 0
    %177 = vmatpush.msra.mxu0 0.0
    %178 = vmatpush.msra.mxu0 0.0
    %179 = vmatpush.msra.mxu0 0.0
    %180 = vmatpush.msra.mxu0 0.0
    %181 = vmatpush.msra.mxu0 0.0
    %182 = vmatpush.msra.mxu0 0.0
    %183 = vmatpush.msra.mxu0 0.0
    %184 = vmatpush.msra.mxu0 0.0
    %185 = vmatpush.msra.mxu0 0.0
    %186 = vmatpush.msra.mxu0 0.0
    %187 = vmatpush.msra.mxu0 0.0
    %188 = vmatpush.msra.mxu0 0.0
    %189 = vmatpush.msra.mxu0 %v83
    %190 = vmatpush.msra.mxu0 %v82
    %191 = vmatpush.msra.mxu0 %v81
    %192 = vmatpush.msra.mxu0 %v80
    %193 = vmatmul.f32.gmra.mxu0 %v175
    %v194 = vpop.f32.mrf.mxu0
    %v195 = vadd.f32 0.0, %v194
    %196 = vdwg.mxu0
    %v197 = vadd.f32 %v150, %v195
    %v198 = vtanh.pop %v197
    %v200 = vsel %vm128, %v198, 0
    %202 = vmatpush.msra.mxu0 0.0
    %203 = vmatpush.msra.mxu0 0.0
    %204 = vmatpush.msra.mxu0 0.0
    %205 = vmatpush.msra.mxu0 0.0
    %206 = vmatpush.msra.mxu0 0.0
    %207 = vmatpush.msra.mxu0 0.0
    %208 = vmatpush.msra.mxu0 0.0
    %209 = vmatpush.msra.mxu0 0.0
    %210 = vmatpush.msra.mxu0 0.0
    %211 = vmatpush.msra.mxu0 0.0
    %212 = vmatpush.msra.mxu0 0.0
    %213 = vmatpush.msra.mxu0 0.0
    %214 = vmatpush.msra.mxu0 %v87
    %215 = vmatpush.msra.mxu0 %v86
    %216 = vmatpush.msra.mxu0 %v85
    %217 = vmatpush.msra.mxu0 %v84
    %218 = vmatmul.f32.gmra.mxu0 %v200
    %v219 = vpop.f32.mrf.mxu0
    %v220 = vadd.f32 %v126, %v219
    %221 = vdwg.mxu0
    %222 = vmatpush.msra.mxu0 0.0
    %223 = vmatpush.msra.mxu0 0.0
    %224 = vmatpush.msra.mxu0 0.0
    %225 = vmatpush.msra.mxu0 0.0
    %226 = vmatpush.msra.mxu0 0.0
    %227 = vmatpush.msra.mxu0 0.0
    %228 = vmatpush.msra.mxu0 0.0
    %229 = vmatpush.msra.mxu0 0.0
    %230 = vmatpush.msra.mxu0 0.0
    %231 = vmatpush.msra.mxu0 0.0
    %232 = vmatpush.msra.mxu0 0.0
    %233 = vmatpush.msra.mxu0 0.0
    %234 = vmatpush.msra.mxu0 %v79
    %235 = vmatpush.msra.mxu0 %v78
    %236 = vmatpush.msra.mxu0 %v77
    %237 = vmatpush.msra.mxu0 %v76
    %238 = vmatmul.f32.gmra.mxu0 %v175
    %v239 = vpop.f32.mrf.mxu0
    %v240 = vadd.f32 0.0, %v239
    %241 = vdwg.mxu0
    %v243 = vrot.slane %v240, 6
    %v245 = vadd.f32 %v120, %v243
    %v246 = vtanh.pop %v245
    %v248 = vrot.slane %v246, 2
    %v249 = vsel %vm128, %v248, 0
    %251 = vmatpush.msra.mxu0 0.0
    %252 = vmatpush.msra.mxu0 0.0
    %253 = vmatpush.msra.mxu0 0.0
    %254 = vmatpush.msra.mxu0 0.0
    %255 = vmatpush.msra.mxu0 0.0
    %256 = vmatpush.msra.mxu0 0.0
    %257 = vmatpush.msra.mxu0 0.0
    %258 = vmatpush.msra.mxu0 0.0
    %259 = vmatpush.msra.mxu0 0.0
    %260 = vmatpush.msra.mxu0 0.0
    %261 = vmatpush.msra.mxu0 0.0
    %262 = vmatpush.msra.mxu0 0.0
    %263 = vmatpush.msra.mxu0 %v83
    %264 = vmatpush.msra.mxu0 %v82
    %265 = vmatpush.msra.mxu0 %v81
    %266 = vmatpush.msra.mxu0 %v80
    %267 = vmatmul.f32.gmra.mxu0 %v249
    %v268 = vpop.f32.mrf.mxu0
    %v269 = vadd.f32 0.0, %v268
    %270 = vdwg.mxu0
    %v271 = vadd.f32 %v220, %v269
    %v272 = vtanh.pop %v271
    %v274 = vsel %vm128, %v272, 0
    %276 = vmatpush.msra.mxu0 0.0
    %277 = vmatpush.msra.mxu0 0.0
    %278 = vmatpush.msra.mxu0 0.0
    %279 = vmatpush.msra.mxu0 0.0
    %280 = vmatpush.msra.mxu0 0.0
    %281 = vmatpush.msra.mxu0 0.0
    %282 = vmatpush.msra.mxu0 0.0
    %283 = vmatpush.msra.mxu0 0.0
    %284 = vmatpush.msra.mxu0 0.0
    %285 = vmatpush.msra.mxu0 0.0
    %286 = vmatpush.msra.mxu0 0.0
    %287 = vmatpush.msra.mxu0 0.0
    %288 = vmatpush.msra.mxu0 %v87
    %289 = vmatpush.msra.mxu0 %v86
    %290 = vmatpush.msra.mxu0 %v85
    %291 = vmatpush.msra.mxu0 %v84
    %292 = vmatmul.f32.gmra.mxu0 %v274
    %v293 = vpop.f32.mrf.mxu0
    %v294 = vadd.f32 %v126, %v293
    %295 = vdwg.mxu0
    %296 = vmatpush.msra.mxu0 0.0
    %297 = vmatpush.msra.mxu0 0.0
    %298 = vmatpush.msra.mxu0 0.0
    %299 = vmatpush.msra.mxu0 0.0
    %300 = vmatpush.msra.mxu0 0.0
    %301 = vmatpush.msra.mxu0 0.0
    %302 = vmatpush.msra.mxu0 0.0
    %303 = vmatpush.msra.mxu0 0.0
    %304 = vmatpush.msra.mxu0 0.0
    %305 = vmatpush.msra.mxu0 0.0
    %306 = vmatpush.msra.mxu0 0.0
    %307 = vmatpush.msra.mxu0 0.0
    %308 = vmatpush.msra.mxu0 %v79
    %309 = vmatpush.msra.mxu0 %v78
    %310 = vmatpush.msra.mxu0 %v77
    %311 = vmatpush.msra.mxu0 %v76
    %312 = vmatmul.f32.gmra.mxu0 %v249
    %v313 = vpop.f32.mrf.mxu0
    %v314 = vadd.f32 0.0, %v313
    %315 = vdwg.mxu0
    %v317 = vrot.slane %v314, 4
    %v319 = vadd.f32 %v120, %v317
    %v320 = vtanh.pop %v319
    %v322 = vrot.slane %v320, 4
    %v323 = vsel %vm128, %v322, 0
    %325 = vmatpush.msra.mxu0 0.0
    %326 = vmatpush.msra.mxu0 0.0
    %327 = vmatpush.msra.mxu0 0.0
    %328 = vmatpush.msra.mxu0 0.0
    %329 = vmatpush.msra.mxu0 0.0
    %330 = vmatpush.msra.mxu0 0.0
    %331 = vmatpush.msra.mxu0 0.0
    %332 = vmatpush.msra.mxu0 0.0
    %333 = vmatpush.msra.mxu0 0.0
    %334 = vmatpush.msra.mxu0 0.0
    %335 = vmatpush.msra.mxu0 0.0
    %336 = vmatpush.msra.mxu0 0.0
    %337 = vmatpush.msra.mxu0 %v83
    %338 = vmatpush.msra.mxu0 %v82
    %339 = vmatpush.msra.mxu0 %v81
    %340 = vmatpush.msra.mxu0 %v80
    %341 = vmatmul.f32.gmra.mxu0 %v323
    %v342 = vpop.f32.mrf.mxu0
    %v343 = vadd.f32 0.0, %v342
    %344 = vdwg.mxu0
    %v345 = vadd.f32 %v294, %v343
    %v346 = vtanh.pop %v345
    %v348 = vsel %vm128, %v346, 0
    %350 = vmatpush.msra.mxu0 0.0
    %351 = vmatpush.msra.mxu0 0.0
    %352 = vmatpush.msra.mxu0 0.0
    %353 = vmatpush.msra.mxu0 0.0
    %354 = vmatpush.msra.mxu0 0.0
    %355 = vmatpush.msra.mxu0 0.0
    %356 = vmatpush.msra.mxu0 0.0
    %357 = vmatpush.msra.mxu0 0.0
    %358 = vmatpush.msra.mxu0 0.0
    %359 = vmatpush.msra.mxu0 0.0
    %360 = vmatpush.msra.mxu0 0.0
    %361 = vmatpush.msra.mxu0 0.0
    %362 = vmatpush.msra.mxu0 %v87
    %363 = vmatpush.msra.mxu0 %v86
    %364 = vmatpush.msra.mxu0 %v85
    %365 = vmatpush.msra.mxu0 %v84
    %366 = vmatmul.f32.gmra.mxu0 %v348
    %v367 = vpop.f32.mrf.mxu0
    %v368 = vadd.f32 %v126, %v367
    %369 = vdwg.mxu0
    %370 = vmatpush.msra.mxu0 0.0
    %371 = vmatpush.msra.mxu0 0.0
    %372 = vmatpush.msra.mxu0 0.0
    %373 = vmatpush.msra.mxu0 0.0
    %374 = vmatpush.msra.mxu0 0.0
    %375 = vmatpush.msra.mxu0 0.0
    %376 = vmatpush.msra.mxu0 0.0
    %377 = vmatpush.msra.mxu0 0.0
    %378 = vmatpush.msra.mxu0 0.0
    %379 = vmatpush.msra.mxu0 0.0
    %380 = vmatpush.msra.mxu0 0.0
    %381 = vmatpush.msra.mxu0 0.0
    %382 = vmatpush.msra.mxu0 %v79
    %383 = vmatpush.msra.mxu0 %v78
    %384 = vmatpush.msra.mxu0 %v77
    %385 = vmatpush.msra.mxu0 %v76
    %386 = vmatmul.f32.gmra.mxu0 %v323
    %v387 = vpop.f32.mrf.mxu0
    %v388 = vadd.f32 0.0, %v387
    %389 = vdwg.mxu0
    %v391 = vrot.slane %v388, 2
    %v393 = vadd.f32 %v120, %v391
    %v394 = vtanh.pop %v393
    %v396 = vrot.slane %v394, 6
    %v397 = vsel %vm128, %v396, 0
    %399 = vmatpush.msra.mxu0 0.0
    %400 = vmatpush.msra.mxu0 0.0
    %401 = vmatpush.msra.mxu0 0.0
    %402 = vmatpush.msra.mxu0 0.0
    %403 = vmatpush.msra.mxu0 0.0
    %404 = vmatpush.msra.mxu0 0.0
    %405 = vmatpush.msra.mxu0 0.0
    %406 = vmatpush.msra.mxu0 0.0
    %407 = vmatpush.msra.mxu0 0.0
    %408 = vmatpush.msra.mxu0 0.0
    %409 = vmatpush.msra.mxu0 0.0
    %410 = vmatpush.msra.mxu0 0.0
    %411 = vmatpush.msra.mxu0 %v83
    %412 = vmatpush.msra.mxu0 %v82
    %413 = vmatpush.msra.mxu0 %v81
    %414 = vmatpush.msra.mxu0 %v80
    %415 = vmatmul.f32.gmra.mxu0 %v397
    %v416 = vpop.f32.mrf.mxu0
    %v417 = vadd.f32 0.0, %v416
    %418 = vdwg.mxu0
    %v419 = vadd.f32 %v368, %v417
    %v420 = vtanh.pop %v419
    %v422 = vsel %vm128, %v420, 0
    %424 = vmatpush.msra.mxu0 0.0
    %425 = vmatpush.msra.mxu0 0.0
    %426 = vmatpush.msra.mxu0 0.0
    %427 = vmatpush.msra.mxu0 0.0
    %428 = vmatpush.msra.mxu0 0.0
    %429 = vmatpush.msra.mxu0 0.0
    %430 = vmatpush.msra.mxu0 0.0
    %431 = vmatpush.msra.mxu0 0.0
    %432 = vmatpush.msra.mxu0 0.0
    %433 = vmatpush.msra.mxu0 0.0
    %434 = vmatpush.msra.mxu0 0.0
    %435 = vmatpush.msra.mxu0 0.0
    %436 = vmatpush.msra.mxu0 %v87
    %437 = vmatpush.msra.mxu0 %v86
    %438 = vmatpush.msra.mxu0 %v85
    %439 = vmatpush.msra.mxu0 %v84
    %440 = vmatmul.f32.gmra.mxu0 %v422
    %v441 = vpop.f32.mrf.mxu0
    %v442 = vadd.f32 %v126, %v441
    %443 = vdwg.mxu0
    %444 = vmatpush.msra.mxu0 0.0
    %445 = vmatpush.msra.mxu0 0.0
    %446 = vmatpush.msra.mxu0 0.0
    %447 = vmatpush.msra.mxu0 0.0
    %448 = vmatpush.msra.mxu0 0.0
    %449 = vmatpush.msra.mxu0 0.0
    %450 = vmatpush.msra.mxu0 0.0
    %451 = vmatpush.msra.mxu0 0.0
    %452 = vmatpush.msra.mxu0 0.0
    %453 = vmatpush.msra.mxu0 0.0
    %454 = vmatpush.msra.mxu0 0.0
    %455 = vmatpush.msra.mxu0 0.0
    %456 = vmatpush.msra.mxu0 %v79
    %457 = vmatpush.msra.mxu0 %v78
    %458 = vmatpush.msra.mxu0 %v77
    %459 = vmatpush.msra.mxu0 %v76
    %460 = vmatmul.f32.gmra.mxu0 %v397
    %v461 = vpop.f32.mrf.mxu0
    %v462 = vadd.f32 0.0, %v461
    %463 = vdwg.mxu0
    %v464 = vadd.f32 %v123, %v462
    %v465 = vtanh.pop %v464
    %v467 = vsel %vm128, %v465, 0
    %469 = vmatpush.msra.mxu0 0.0
    %470 = vmatpush.msra.mxu0 0.0
    %471 = vmatpush.msra.mxu0 0.0
    %472 = vmatpush.msra.mxu0 0.0
    %473 = vmatpush.msra.mxu0 0.0
    %474 = vmatpush.msra.mxu0 0.0
    %475 = vmatpush.msra.mxu0 0.0
    %476 = vmatpush.msra.mxu0 0.0
    %477 = vmatpush.msra.mxu0 0.0
    %478 = vmatpush.msra.mxu0 0.0
    %479 = vmatpush.msra.mxu0 0.0
    %480 = vmatpush.msra.mxu0 0.0
    %481 = vmatpush.msra.mxu0 %v83
    %482 = vmatpush.msra.mxu0 %v82
    %483 = vmatpush.msra.mxu0 %v81
    %484 = vmatpush.msra.mxu0 %v80
    %485 = vmatmul.f32.gmra.mxu0 %v467
    %v486 = vpop.f32.mrf.mxu0
    %v487 = vadd.f32 0.0, %v486
    %488 = vdwg.mxu0
    %v489 = vadd.f32 %v442, %v487
    %v490 = vtanh.pop %v489
    %v492 = vsel %vm128, %v490, 0
    %494 = vmatpush.msra.mxu0 0.0
    %495 = vmatpush.msra.mxu0 0.0
    %496 = vmatpush.msra.mxu0 0.0
    %497 = vmatpush.msra.mxu0 0.0
    %498 = vmatpush.msra.mxu0 0.0
    %499 = vmatpush.msra.mxu0 0.0
    %500 = vmatpush.msra.mxu0 0.0
    %501 = vmatpush.msra.mxu0 0.0
    %502 = vmatpush.msra.mxu0 0.0
    %503 = vmatpush.msra.mxu0 0.0
    %504 = vmatpush.msra.mxu0 0.0
    %505 = vmatpush.msra.mxu0 0.0
    %506 = vmatpush.msra.mxu0 %v87
    %507 = vmatpush.msra.mxu0 %v86
    %508 = vmatpush.msra.mxu0 %v85
    %509 = vmatpush.msra.mxu0 %v84
    %510 = vmatmul.f32.gmra.mxu0 %v492
    %v511 = vpop.f32.mrf.mxu0
    %v512 = vadd.f32 %v126, %v511
    %513 = vdwg.mxu0
    %514 = vmatpush.msra.mxu0 0.0
    %515 = vmatpush.msra.mxu0 0.0
    %516 = vmatpush.msra.mxu0 0.0
    %517 = vmatpush.msra.mxu0 0.0
    %518 = vmatpush.msra.mxu0 0.0
    %519 = vmatpush.msra.mxu0 0.0
    %520 = vmatpush.msra.mxu0 0.0
    %521 = vmatpush.msra.mxu0 0.0
    %522 = vmatpush.msra.mxu0 0.0
    %523 = vmatpush.msra.mxu0 0.0
    %524 = vmatpush.msra.mxu0 0.0
    %525 = vmatpush.msra.mxu0 0.0
    %526 = vmatpush.msra.mxu0 %v79
    %527 = vmatpush.msra.mxu0 %v78
    %528 = vmatpush.msra.mxu0 %v77
    %529 = vmatpush.msra.mxu0 %v76
    %530 = vmatmul.f32.gmra.mxu0 %v467
    %v531 = vpop.f32.mrf.mxu0
    %v532 = vadd.f32 0.0, %v531
    %533 = vdwg.mxu0
    %v535 = vrot.slane %v532, 6
    %v537 = vadd.f32 %v123, %v535
    %v538 = vtanh.pop %v537
    %v540 = vrot.slane %v538, 2
    %v541 = vsel %vm128, %v540, 0
    %543 = vmatpush.msra.mxu0 0.0
    %544 = vmatpush.msra.mxu0 0.0
    %545 = vmatpush.msra.mxu0 0.0
    %546 = vmatpush.msra.mxu0 0.0
    %547 = vmatpush.msra.mxu0 0.0
    %548 = vmatpush.msra.mxu0 0.0
    %549 = vmatpush.msra.mxu0 0.0
    %550 = vmatpush.msra.mxu0 0.0
    %551 = vmatpush.msra.mxu0 0.0
    %552 = vmatpush.msra.mxu0 0.0
    %553 = vmatpush.msra.mxu0 0.0
    %554 = vmatpush.msra.mxu0 0.0
    %555 = vmatpush.msra.mxu0 %v83
    %556 = vmatpush.msra.mxu0 %v82
    %557 = vmatpush.msra.mxu0 %v81
    %558 = vmatpush.msra.mxu0 %v80
    %559 = vmatmul.f32.gmra.mxu0 %v541
    %v560 = vpop.f32.mrf.mxu0
    %v561 = vadd.f32 0.0, %v560
    %562 = vdwg.mxu0
    %v563 = vadd.f32 %v512, %v561
    %v564 = vtanh.pop %v563
    %v566 = vsel %vm128, %v564, 0
    %568 = vmatpush.msra.mxu0 0.0
    %569 = vmatpush.msra.mxu0 0.0
    %570 = vmatpush.msra.mxu0 0.0
    %571 = vmatpush.msra.mxu0 0.0
    %572 = vmatpush.msra.mxu0 0.0
    %573 = vmatpush.msra.mxu0 0.0
    %574 = vmatpush.msra.mxu0 0.0
    %575 = vmatpush.msra.mxu0 0.0
    %576 = vmatpush.msra.mxu0 0.0
    %577 = vmatpush.msra.mxu0 0.0
    %578 = vmatpush.msra.mxu0 0.0
    %579 = vmatpush.msra.mxu0 0.0
    %580 = vmatpush.msra.mxu0 %v87
    %581 = vmatpush.msra.mxu0 %v86
    %582 = vmatpush.msra.mxu0 %v85
    %583 = vmatpush.msra.mxu0 %v84
    %584 = vmatmul.f32.gmra.mxu0 %v566
    %v585 = vpop.f32.mrf.mxu0
    %v586 = vadd.f32 %v126, %v585
    %587 = vdwg.mxu0
    %588 = vmatpush.msra.mxu0 0.0
    %589 = vmatpush.msra.mxu0 0.0
    %590 = vmatpush.msra.mxu0 0.0
    %591 = vmatpush.msra.mxu0 0.0
    %592 = vmatpush.msra.mxu0 0.0
    %593 = vmatpush.msra.mxu0 0.0
    %594 = vmatpush.msra.mxu0 0.0
    %595 = vmatpush.msra.mxu0 0.0
    %596 = vmatpush.msra.mxu0 0.0
    %597 = vmatpush.msra.mxu0 0.0
    %598 = vmatpush.msra.mxu0 0.0
    %599 = vmatpush.msra.mxu0 0.0
    %600 = vmatpush.msra.mxu0 %v79
    %601 = vmatpush.msra.mxu0 %v78
    %602 = vmatpush.msra.mxu0 %v77
    %603 = vmatpush.msra.mxu0 %v76
    %604 = vmatmul.f32.gmra.mxu0 %v541
    %v605 = vpop.f32.mrf.mxu0
    %v606 = vadd.f32 0.0, %v605
    %607 = vdwg.mxu0
    %v609 = vrot.slane %v606, 4
    %v611 = vadd.f32 %v123, %v609
    %v612 = vtanh.pop %v611
    %v614 = vrot.slane %v612, 4
    %v615 = vsel %vm128, %v614, 0
    %617 = vmatpush.msra.mxu0 0.0
    %618 = vmatpush.msra.mxu0 0.0
    %619 = vmatpush.msra.mxu0 0.0
    %620 = vmatpush.msra.mxu0 0.0
    %621 = vmatpush.msra.mxu0 0.0
    %622 = vmatpush.msra.mxu0 0.0
    %623 = vmatpush.msra.mxu0 0.0
    %624 = vmatpush.msra.mxu0 0.0
    %625 = vmatpush.msra.mxu0 0.0
    %626 = vmatpush.msra.mxu0 0.0
    %627 = vmatpush.msra.mxu0 0.0
    %628 = vmatpush.msra.mxu0 0.0
    %629 = vmatpush.msra.mxu0 %v83
    %630 = vmatpush.msra.mxu0 %v82
    %631 = vmatpush.msra.mxu0 %v81
    %632 = vmatpush.msra.mxu0 %v80
    %633 = vmatmul.f32.gmra.mxu0 %v615
    %v634 = vpop.f32.mrf.mxu0
    %v635 = vadd.f32 0.0, %v634
    %636 = vdwg.mxu0
    %v637 = vadd.f32 %v586, %v635
    %v638 = vtanh.pop %v637
    %v640 = vsel %vm128, %v638, 0
    %642 = vmatpush.msra.mxu0 0.0
    %643 = vmatpush.msra.mxu0 0.0
    %644 = vmatpush.msra.mxu0 0.0
    %645 = vmatpush.msra.mxu0 0.0
    %646 = vmatpush.msra.mxu0 0.0
    %647 = vmatpush.msra.mxu0 0.0
    %648 = vmatpush.msra.mxu0 0.0
    %649 = vmatpush.msra.mxu0 0.0
    %650 = vmatpush.msra.mxu0 0.0
    %651 = vmatpush.msra.mxu0 0.0
    %652 = vmatpush.msra.mxu0 0.0
    %653 = vmatpush.msra.mxu0 0.0
    %654 = vmatpush.msra.mxu0 %v87
    %655 = vmatpush.msra.mxu0 %v86
    %656 = vmatpush.msra.mxu0 %v85
    %657 = vmatpush.msra.mxu0 %v84
    %658 = vmatmul.f32.gmra.mxu0 %v640
    %v659 = vpop.f32.mrf.mxu0
    %v660 = vadd.f32 %v126, %v659
    %661 = vdwg.mxu0
    %662 = vmatpush.msra.mxu0 0.0
    %663 = vmatpush.msra.mxu0 0.0
    %664 = vmatpush.msra.mxu0 0.0
    %665 = vmatpush.msra.mxu0 0.0
    %666 = vmatpush.msra.mxu0 0.0
    %667 = vmatpush.msra.mxu0 0.0
    %668 = vmatpush.msra.mxu0 0.0
    %669 = vmatpush.msra.mxu0 0.0
    %670 = vmatpush.msra.mxu0 0.0
    %671 = vmatpush.msra.mxu0 0.0
    %672 = vmatpush.msra.mxu0 0.0
    %673 = vmatpush.msra.mxu0 0.0
    %674 = vmatpush.msra.mxu0 %v79
    %675 = vmatpush.msra.mxu0 %v78
    %676 = vmatpush.msra.mxu0 %v77
    %677 = vmatpush.msra.mxu0 %v76
    %678 = vmatmul.f32.gmra.mxu0 %v615
    %v679 = vpop.f32.mrf.mxu0
    %v680 = vadd.f32 0.0, %v679
    %681 = vdwg.mxu0
    %v683 = vrot.slane %v680, 2
    %v685 = vadd.f32 %v123, %v683
    %v686 = vtanh.pop %v685
    %v688 = vrot.slane %v686, 6
    %v689 = vsel %vm128, %v688, 0
    %691 = vmatpush.msra.mxu0 0.0
    %692 = vmatpush.msra.mxu0 0.0
    %693 = vmatpush.msra.mxu0 0.0
    %694 = vmatpush.msra.mxu0 0.0
    %695 = vmatpush.msra.mxu0 0.0
    %696 = vmatpush.msra.mxu0 0.0
    %697 = vmatpush.msra.mxu0 0.0
    %698 = vmatpush.msra.mxu0 0.0
    %699 = vmatpush.msra.mxu0 0.0
    %700 = vmatpush.msra.mxu0 0.0
    %701 = vmatpush.msra.mxu0 0.0
    %702 = vmatpush.msra.mxu0 0.0
    %703 = vmatpush.msra.mxu0 %v83
    %704 = vmatpush.msra.mxu0 %v82
    %705 = vmatpush.msra.mxu0 %v81
    %706 = vmatpush.msra.mxu0 %v80
    %707 = vmatmul.f32.gmra.mxu0 %v689
    %v708 = vpop.f32.mrf.mxu0
    %v709 = vadd.f32 0.0, %v708
    %710 = vdwg.mxu0
    %v711 = vadd.f32 %v660, %v709
    %v712 = vtanh.pop %v711
    %713 = vrot.lane.b32.xlu0 %v272, 32
    %v714 = vpop.permute.xlu0 %713
    %716 = vrot.lane.b32.xlu0 %v346, 64
    %v717 = vpop.permute.xlu0 %716
    %719 = vrot.lane.b32.xlu0 %v420, 96
    %v720 = vpop.permute.xlu0 %719
    %722 = vrot.lane.b32.xlu0 %v564, 32
    %v723 = vpop.permute.xlu0 %722
    %725 = vrot.lane.b32.xlu0 %v638, 64
    %v726 = vpop.permute.xlu0 %725
    %729 = vrot.lane.b32.xlu0 %v712, 96
    %v730 = vpop.permute.xlu0 %729
    %v732 = vsel %vm128, %v198, %v714
    %vm733 = vcmask 523264
    %v734 = vsel %vm733, %v732, %v717
    %vm735 = vcmask 785408
    %v736 = vsel %vm735, %v734, %v720
    %v737 = vsel %vm128, %v490, %v723
    %v738 = vsel %vm733, %v737, %v726
    %v739 = vsel %vm735, %v738, %v730
    %v742 = vrot.slane %v739, 6
    %vm743 = vcmask 1041408
    %v744 = vsel %vm743, %v736, %v742
    %746 = vst [vmem:[#allocation8] sm:$0xf] %v744
    // Predicated region
    $region42: #{vanilla_rnn_forward.1} parent=1 // pred_check
      _
    $region43: #{vanilla_rnn_forward.1} parent=1 // pred_check_branch
      %748 = sbr.rel (0) target = $region45
    $region44: #{vanilla_rnn_forward.1} parent=1 // pred_region
      %750 = vsyncadd [#allocation4], 0
      %s752 = sshll.u32 [#allocation8], 4
      %s753 = int_to_ptr.vmem [resolvable:$true] %s752
      %s754 = sshll.u32 %s7, 4
      %s755 = int_to_ptr.hbm [resolvable:$true] %s754
      %757 = dma.vmem_to_hbm [thread:$0]  %s753, 64, %s755, [#allocation4]
    $region45: #{vanilla_rnn_forward.1} parent=1 // pred_fallthru
      _
    // Predicated region
    $region46: #{vanilla_rnn_forward.1} parent=1 // pred_check
      _
    $region47: #{vanilla_rnn_forward.1} parent=1 // pred_check_branch
      %759 = sbr.rel (0) target = $region49
    $region48: #{vanilla_rnn_forward.1} parent=1 // pred_region
      %761 = dma.done [#allocation4], 64
    $region49: #{vanilla_rnn_forward.1} parent=1 // pred_fallthru
      _
    %762 = vsyncpa [#allocation3], 1
    %763 = vsyncpa [#allocation6], 1
    %764 = vsyncpa [#allocation4], 1

</llo_original>
